<compile_context>
chip_gen: v5e
topology: v5e:2x2
jax: 0.10.0
libtpu: 0.0.40
codegen_flags: <defaults>
</compile_context>

<pallas_src>
from functools import partial

import jax
import jax.numpy as jnp
from jax.experimental import pallas as pl
from jax.experimental.pallas import tpu as pltpu


# --------------------------------------------------------------------------
# Pallas kernel: whole GLUBlock, all operands resident in VMEM.
# --------------------------------------------------------------------------
def glu_block_kernel(x_ref, mask_ref, dw_ref, db_ref, pw_ref, pb_ref, ln_ref,
                     out_ref, *, seq_len, ksize):
    x = x_ref[...]                       # (M, C) f32, M = B*S
    pad_col = mask_ref[...] > 0.5        # (M, 1)  True at padded positions
    dw = dw_ref[...]                     # (2, K, C) depthwise weights (v, u)
    db = db_ref[...]                     # (2, C)    depthwise biases
    pw = pw_ref[...]                     # (2, C, C) pointwise (1x1) weights
    pb = pb_ref[...]                     # (2, C)    pointwise biases
    ln = ln_ref[...]                     # (2, C)    layer-norm gamma / beta

    M, C = x.shape
    pad = ksize // 2

    # intra-sequence index of every flattened row; used to zero conv taps that
    # would read across a sequence (== batch) boundary or outside [0, S).
    s_idx = jax.lax.broadcasted_iota(jnp.int32, (M, C), 0) % seq_len

    # ---- depthwise convs (both paths share the shifted input per tap) -----
    acc_v = jnp.zeros((M, C), jnp.float32) + db[0][None, :]
    acc_u = jnp.zeros((M, C), jnp.float32) + db[1][None, :]
    for j in range(ksize):
        d = j - pad
        if d == 0:
            tap = x
        else:
            # rolled[s] = x[(s + d) % M]   (XLU sublane rotate, no copies)
            rolled = pltpu.roll(x, shift=(-d) % M, axis=0)
            valid = jnp.logical_and(s_idx + d >= 0, s_idx + d < seq_len)
            tap = jnp.where(valid, rolled, 0.0)
        acc_v = acc_v + dw[0, j][None, :] * tap
        acc_u = acc_u + dw[1, j][None, :] * tap

    # ---- pointwise (1x1) convs = matmuls over the channel axis ------------
    v = jnp.dot(acc_v, pw[0], preferred_element_type=jnp.float32) + pb[0][None, :]
    u_pre = jnp.dot(acc_u, pw[1], preferred_element_type=jnp.float32) + pb[1][None, :]

    # sigmoid gate: exp + approximate reciprocal both run on the EUP slot
    u = pl.reciprocal(1.0 + jnp.exp(-u_pre), approx=True)

    # ---- GLU combine, LayerNorm, final masked_fill -------------------------
    hidden = x * (1.0 - u) + v * u

    mu = jnp.mean(hidden, axis=-1, keepdims=True)
    var = jnp.mean((hidden - mu) ** 2, axis=-1, keepdims=True)
    normed = (hidden - mu) * jax.lax.rsqrt(var + 1e-5) * ln[0][None, :] + ln[1][None, :]

    out_ref[...] = jnp.where(pad_col, 0.0, normed)


def glu_block_pallas(x, padding_mask, p, *, kernel_size):
    """x: (B, S, C) f32, padding_mask: (B, S) bool -> (B, S, C) f32."""
    B, S, C = x.shape
    M = B * S
    x2 = x.reshape(M, C).astype(jnp.float32)
    mask2 = padding_mask.astype(jnp.float32).reshape(M, 1)

    # pack the 10 tiny parameter tensors into 5 arrays (fewer DMAs / windows)
    dw = jnp.stack([p["dw_v"], p["dw_u"]])      # (2, K, C)
    db = jnp.stack([p["db_v"], p["db_u"]])      # (2, C)
    pw = jnp.stack([p["pw_v"], p["pw_u"]])      # (2, C, C)
    pb = jnp.stack([p["pb_v"], p["pb_u"]])      # (2, C)
    ln = jnp.stack([p["ln_g"], p["ln_b"]])      # (2, C)

    args = (x2, mask2, dw, db, pw, pb, ln)
    kernel = partial(glu_block_kernel, seq_len=S, ksize=kernel_size)
    out2 = pl.pallas_call(
        kernel,
        out_shape=jax.ShapeDtypeStruct((M, C), jnp.float32),
        in_specs=[pl.BlockSpec(memory_space=pltpu.MemorySpace.VMEM)] * len(args),
        out_specs=pl.BlockSpec(memory_space=pltpu.MemorySpace.VMEM),
        compiler_params=pltpu.CompilerParams(vmem_limit_bytes=32 * 1024 * 1024),
    )(*args)
    return out2.reshape(B, S, C)


# --------------------------------------------------------------------------
# Pure-JAX reference (faithful to the PyTorch module, eval mode).
# --------------------------------------------------------------------------
def sep_conv_ref(x, dw, db, pw, pb):
    B, S, C = x.shape
    K = dw.shape[0]
    pad = K // 2
    xp = jnp.pad(x, ((0, 0), (pad, pad), (0, 0)))
    acc = jnp.broadcast_to(db[None, None, :], x.shape).astype(jnp.float32)
    for j in range(K):
        acc = acc + dw[j][None, None, :] * xp[:, j:j + S, :]
    return jnp.einsum("bsc,cd->bsd", acc, pw) + pb[None, None, :]


def glu_block_ref(x, padding_mask, p):
    v = sep_conv_ref(x, p["dw_v"], p["db_v"], p["pw_v"], p["pb_v"])
    u = jax.nn.sigmoid(sep_conv_ref(x, p["dw_u"], p["db_u"], p["pw_u"], p["pb_u"]))
    hidden = x * (1.0 - u) + v * u
    mu = jnp.mean(hidden, axis=-1, keepdims=True)
    var = jnp.mean((hidden - mu) ** 2, axis=-1, keepdims=True)
    normed = (hidden - mu) / jnp.sqrt(var + 1e-5) * p["ln_g"] + p["ln_b"]
    return jnp.where(padding_mask[..., None], 0.0, normed)


def init_params(key, C, K):
    ks = jax.random.split(key, 10)
    n = lambda kk, shape, s=0.3: (s * jax.random.normal(kk, shape)).astype(jnp.float32)
    return {
        # SepConv "conv1" (v path): depthwise (K, C) + bias, pointwise (C, C) + bias
        "dw_v": n(ks[0], (K, C)), "db_v": n(ks[1], (C,), 0.05),
        "pw_v": n(ks[2], (C, C)), "pb_v": n(ks[3], (C,), 0.05),
        # SepConv "conv2" (u / gate path)
        "dw_u": n(ks[4], (K, C)), "db_u": n(ks[5], (C,), 0.05),
        "pw_u": n(ks[6], (C, C)), "pb_u": n(ks[7], (C,), 0.05),
        # LayerNorm(output_dims)
        "ln_g": (1.0 + 0.1 * jax.random.normal(ks[8], (C,))).astype(jnp.float32),
        "ln_b": n(ks[9], (C,), 0.05),
    }


if __name__ == "__main__":
    B, S, C, K = 2, 16, 32, 3          # input_dims == output_dims == 32, kernel_size = 3

    root = jax.random.PRNGKey(0)
    kx, kp = jax.random.split(root)

    x = jax.random.normal(kx, (B, S, C), dtype=jnp.float32)
    padding_mask = jnp.zeros((B, S), dtype=bool).at[0, 12:].set(True).at[1, 9:].set(True)
    params = init_params(kp, C, K)

    out = glu_block_pallas(x, padding_mask, params, kernel_size=K)
    ref = glu_block_ref(x, padding_mask, params)

    out = jax.block_until_ready(out)
    ref = jax.block_until_ready(ref)

    assert out.shape == (B, S, C)
    assert bool(jnp.all(jnp.isfinite(out)))
    # padded positions must be exactly zero
    assert float(jnp.max(jnp.abs(jnp.where(padding_mask[..., None], out, 0.0)))) == 0.0
    max_err = float(jnp.max(jnp.abs(out - ref)))
    assert max_err < 2e-2, f"pallas vs jax reference mismatch: {max_err}"

    print("KERNEL_OK")
</pallas_src>

<mosaic_0001>
module attributes {stable_mosaic.version = 11 : i64} {
  func.func @glu_block_kernel(%arg0: memref<32x32xf32, #tpu.memory_space<vmem>>, %arg1: memref<32x1xf32, #tpu.memory_space<vmem>>, %arg2: memref<2x3x32xf32, #tpu.memory_space<vmem>>, %arg3: memref<2x32xf32, #tpu.memory_space<vmem>>, %arg4: memref<2x32x32xf32, #tpu.memory_space<vmem>>, %arg5: memref<2x32xf32, #tpu.memory_space<vmem>>, %arg6: memref<2x32xf32, #tpu.memory_space<vmem>>, %arg7: memref<32x32xf32, #tpu.memory_space<vmem>>) attributes {dimension_semantics = [], scalar_prefetch = 0 : i64, scratch_operands = 0 : i64, tpu.core_type = #tpu.core_type<tc>} {
    %c0 = arith.constant 0 : index
    %c0_0 = arith.constant 0 : index
    %0 = vector.load %arg0[%c0, %c0_0] : memref<32x32xf32, #tpu.memory_space<vmem>>, vector<32x32xf32>
    %c0_1 = arith.constant 0 : index
    %c0_2 = arith.constant 0 : index
    %1 = vector.load %arg1[%c0_1, %c0_2] : memref<32x1xf32, #tpu.memory_space<vmem>>, vector<32x1xf32>
    %cst = arith.constant 5.000000e-01 : f32
    %2 = vector.broadcast %cst : f32 to vector<32x1xf32>
    %3 = arith.cmpf ogt, %1, %2 : vector<32x1xf32>
    %c0_3 = arith.constant 0 : index
    %c0_4 = arith.constant 0 : index
    %c0_5 = arith.constant 0 : index
    %4 = vector.load %arg2[%c0_3, %c0_4, %c0_5] : memref<2x3x32xf32, #tpu.memory_space<vmem>>, vector<2x3x32xf32>
    %c0_6 = arith.constant 0 : index
    %c0_7 = arith.constant 0 : index
    %5 = vector.load %arg3[%c0_6, %c0_7] : memref<2x32xf32, #tpu.memory_space<vmem>>, vector<2x32xf32>
    %c0_8 = arith.constant 0 : index
    %c0_9 = arith.constant 0 : index
    %c0_10 = arith.constant 0 : index
    %6 = vector.load %arg4[%c0_8, %c0_9, %c0_10] : memref<2x32x32xf32, #tpu.memory_space<vmem>>, vector<2x32x32xf32>
    %c0_11 = arith.constant 0 : index
    %c0_12 = arith.constant 0 : index
    %7 = vector.load %arg5[%c0_11, %c0_12] : memref<2x32xf32, #tpu.memory_space<vmem>>, vector<2x32xf32>
    %c0_13 = arith.constant 0 : index
    %c0_14 = arith.constant 0 : index
    %8 = vector.load %arg6[%c0_13, %c0_14] : memref<2x32xf32, #tpu.memory_space<vmem>>, vector<2x32xf32>
    %9 = tpu.iota {dimensions = array<i32: 0>} : vector<32x32xi32>
    %c16_i32 = arith.constant 16 : i32
    %c0_i32 = arith.constant 0 : i32
    %10 = arith.cmpi eq, %c16_i32, %c0_i32 : i32
    %c1_i32 = arith.constant 1 : i32
    %11 = arith.select %10, %c1_i32, %c16_i32 : i32
    %12 = vector.broadcast %11 : i32 to vector<32x32xi32>
    %13 = arith.remsi %9, %12 : vector<32x32xi32>
    %c0_i32_15 = arith.constant 0 : i32
    %14 = vector.broadcast %c0_i32_15 : i32 to vector<32x32xi32>
    %15 = arith.cmpi ne, %13, %14 : vector<32x32xi32>
    %c0_i32_16 = arith.constant 0 : i32
    %16 = vector.broadcast %c0_i32_16 : i32 to vector<32x32xi32>
    %17 = arith.cmpi slt, %13, %16 : vector<32x32xi32>
    %c0_i32_17 = arith.constant 0 : i32
    %18 = arith.cmpi slt, %11, %c0_i32_17 : i32
    %19 = vector.broadcast %18 : i1 to vector<32x32xi1>
    %20 = vector.broadcast %19 : vector<32x32xi1> to vector<32x32xi1>
    %21 = arith.xori %17, %20 : vector<32x32xi1>
    %22 = arith.andi %21, %15 : vector<32x32xi1>
    %23 = vector.broadcast %11 : i32 to vector<32x32xi32>
    %24 = arith.addi %13, %23 : vector<32x32xi32>
    %25 = arith.select %22, %24, %13 : vector<32x32xi1>, vector<32x32xi32>
    %cst_18 = arith.constant 0.000000e+00 : f32
    %26 = vector.broadcast %cst_18 : f32 to vector<32x32xf32>
    %27 = vector.extract_strided_slice %5 {offsets = [0, 0], sizes = [1, 32], strides = [1, 1]} : vector<2x32xf32> to vector<1x32xf32>
    %28 = vector.shape_cast %27 : vector<1x32xf32> to vector<32xf32>
    %29 = vector.shape_cast %28 : vector<32xf32> to vector<1x32xf32>
    %30 = vector.broadcast %29 : vector<1x32xf32> to vector<32x32xf32>
    %31 = arith.addf %26, %30 : vector<32x32xf32>
    %cst_19 = arith.constant 0.000000e+00 : f32
    %32 = vector.broadcast %cst_19 : f32 to vector<32x32xf32>
    %33 = vector.extract_strided_slice %5 {offsets = [1, 0], sizes = [1, 32], strides = [1, 1]} : vector<2x32xf32> to vector<1x32xf32>
    %34 = vector.shape_cast %33 : vector<1x32xf32> to vector<32xf32>
    %35 = vector.shape_cast %34 : vector<32xf32> to vector<1x32xf32>
    %36 = vector.broadcast %35 : vector<1x32xf32> to vector<32x32xf32>
    %37 = arith.addf %32, %36 : vector<32x32xf32>
    %c1_i32_20 = arith.constant 1 : i32
    %38 = tpu.dynamic_rotate %0 by %c1_i32_20 dim 0 : vector<32x32xf32>, i32 -> vector<32x32xf32>
    %c-1_i32 = arith.constant -1 : i32
    %39 = vector.broadcast %c-1_i32 : i32 to vector<32x32xi32>
    %40 = arith.addi %25, %39 : vector<32x32xi32>
    %c0_i32_21 = arith.constant 0 : i32
    %41 = vector.broadcast %c0_i32_21 : i32 to vector<32x32xi32>
    %42 = arith.cmpi sge, %40, %41 : vector<32x32xi32>
    %c-1_i32_22 = arith.constant -1 : i32
    %43 = vector.broadcast %c-1_i32_22 : i32 to vector<32x32xi32>
    %44 = arith.addi %25, %43 : vector<32x32xi32>
    %c16_i32_23 = arith.constant 16 : i32
    %45 = vector.broadcast %c16_i32_23 : i32 to vector<32x32xi32>
    %46 = arith.cmpi slt, %44, %45 : vector<32x32xi32>
    %47 = arith.andi %42, %46 : vector<32x32xi1>
    %cst_24 = arith.constant 0.000000e+00 : f32
    %48 = vector.broadcast %cst_24 : f32 to vector<32x32xf32>
    %49 = arith.select %47, %38, %48 : vector<32x32xi1>, vector<32x32xf32>
    %50 = vector.extract_strided_slice %4 {offsets = [0, 0, 0], sizes = [1, 1, 32], strides = [1, 1, 1]} : vector<2x3x32xf32> to vector<1x1x32xf32>
    %51 = vector.shape_cast %50 : vector<1x1x32xf32> to vector<32xf32>
    %52 = vector.shape_cast %51 : vector<32xf32> to vector<1x32xf32>
    %53 = vector.broadcast %52 : vector<1x32xf32> to vector<32x32xf32>
    %54 = arith.mulf %53, %49 : vector<32x32xf32>
    %55 = arith.addf %31, %54 : vector<32x32xf32>
    %56 = vector.extract_strided_slice %4 {offsets = [1, 0, 0], sizes = [1, 1, 32], strides = [1, 1, 1]} : vector<2x3x32xf32> to vector<1x1x32xf32>
    %57 = vector.shape_cast %56 : vector<1x1x32xf32> to vector<32xf32>
    %58 = vector.shape_cast %57 : vector<32xf32> to vector<1x32xf32>
    %59 = vector.broadcast %58 : vector<1x32xf32> to vector<32x32xf32>
    %60 = arith.mulf %59, %49 : vector<32x32xf32>
    %61 = arith.addf %37, %60 : vector<32x32xf32>
    %62 = vector.extract_strided_slice %4 {offsets = [0, 1, 0], sizes = [1, 1, 32], strides = [1, 1, 1]} : vector<2x3x32xf32> to vector<1x1x32xf32>
    %63 = vector.shape_cast %62 : vector<1x1x32xf32> to vector<32xf32>
    %64 = vector.shape_cast %63 : vector<32xf32> to vector<1x32xf32>
    %65 = vector.broadcast %64 : vector<1x32xf32> to vector<32x32xf32>
    %66 = arith.mulf %65, %0 : vector<32x32xf32>
    %67 = arith.addf %55, %66 : vector<32x32xf32>
    %68 = vector.extract_strided_slice %4 {offsets = [1, 1, 0], sizes = [1, 1, 32], strides = [1, 1, 1]} : vector<2x3x32xf32> to vector<1x1x32xf32>
    %69 = vector.shape_cast %68 : vector<1x1x32xf32> to vector<32xf32>
    %70 = vector.shape_cast %69 : vector<32xf32> to vector<1x32xf32>
    %71 = vector.broadcast %70 : vector<1x32xf32> to vector<32x32xf32>
    %72 = arith.mulf %71, %0 : vector<32x32xf32>
    %73 = arith.addf %61, %72 : vector<32x32xf32>
    %c31_i32 = arith.constant 31 : i32
    %74 = tpu.dynamic_rotate %0 by %c31_i32 dim 0 : vector<32x32xf32>, i32 -> vector<32x32xf32>
    %c1_i32_25 = arith.constant 1 : i32
    %75 = vector.broadcast %c1_i32_25 : i32 to vector<32x32xi32>
    %76 = arith.addi %25, %75 : vector<32x32xi32>
    %c0_i32_26 = arith.constant 0 : i32
    %77 = vector.broadcast %c0_i32_26 : i32 to vector<32x32xi32>
    %78 = arith.cmpi sge, %76, %77 : vector<32x32xi32>
    %c1_i32_27 = arith.constant 1 : i32
    %79 = vector.broadcast %c1_i32_27 : i32 to vector<32x32xi32>
    %80 = arith.addi %25, %79 : vector<32x32xi32>
    %c16_i32_28 = arith.constant 16 : i32
    %81 = vector.broadcast %c16_i32_28 : i32 to vector<32x32xi32>
    %82 = arith.cmpi slt, %80, %81 : vector<32x32xi32>
    %83 = arith.andi %78, %82 : vector<32x32xi1>
    %cst_29 = arith.constant 0.000000e+00 : f32
    %84 = vector.broadcast %cst_29 : f32 to vector<32x32xf32>
    %85 = arith.select %83, %74, %84 : vector<32x32xi1>, vector<32x32xf32>
    %86 = vector.extract_strided_slice %4 {offsets = [0, 2, 0], sizes = [1, 1, 32], strides = [1, 1, 1]} : vector<2x3x32xf32> to vector<1x1x32xf32>
    %87 = vector.shape_cast %86 : vector<1x1x32xf32> to vector<32xf32>
    %88 = vector.shape_cast %87 : vector<32xf32> to vector<1x32xf32>
    %89 = vector.broadcast %88 : vector<1x32xf32> to vector<32x32xf32>
    %90 = arith.mulf %89, %85 : vector<32x32xf32>
    %91 = arith.addf %67, %90 : vector<32x32xf32>
    %92 = vector.extract_strided_slice %4 {offsets = [1, 2, 0], sizes = [1, 1, 32], strides = [1, 1, 1]} : vector<2x3x32xf32> to vector<1x1x32xf32>
    %93 = vector.shape_cast %92 : vector<1x1x32xf32> to vector<32xf32>
    %94 = vector.shape_cast %93 : vector<32xf32> to vector<1x32xf32>
    %95 = vector.broadcast %94 : vector<1x32xf32> to vector<32x32xf32>
    %96 = arith.mulf %95, %85 : vector<32x32xf32>
    %97 = arith.addf %73, %96 : vector<32x32xf32>
    %98 = vector.extract_strided_slice %6 {offsets = [0, 0, 0], sizes = [1, 32, 32], strides = [1, 1, 1]} : vector<2x32x32xf32> to vector<1x32x32xf32>
    %99 = vector.shape_cast %98 : vector<1x32x32xf32> to vector<32x32xf32>
    %cst_30 = arith.constant dense<0.000000e+00> : vector<32x32xf32>
    %100 = tpu.matmul %91, %99, %cst_30 {dimension_numbers = #tpu.dot_dimension_numbers<[1], [0], [0], [1], [0, 0, 1, 1], [], []>} : vector<32x32xf32>, vector<32x32xf32>, vector<32x32xf32> -> vector<32x32xf32>
    %101 = vector.extract_strided_slice %7 {offsets = [0, 0], sizes = [1, 32], strides = [1, 1]} : vector<2x32xf32> to vector<1x32xf32>
    %102 = vector.shape_cast %101 : vector<1x32xf32> to vector<32xf32>
    %103 = vector.shape_cast %102 : vector<32xf32> to vector<1x32xf32>
    %104 = vector.broadcast %103 : vector<1x32xf32> to vector<32x32xf32>
    %105 = arith.addf %100, %104 : vector<32x32xf32>
    %106 = vector.extract_strided_slice %6 {offsets = [1, 0, 0], sizes = [1, 32, 32], strides = [1, 1, 1]} : vector<2x32x32xf32> to vector<1x32x32xf32>
    %107 = vector.shape_cast %106 : vector<1x32x32xf32> to vector<32x32xf32>
    %cst_31 = arith.constant dense<0.000000e+00> : vector<32x32xf32>
    %108 = tpu.matmul %97, %107, %cst_31 {dimension_numbers = #tpu.dot_dimension_numbers<[1], [0], [0], [1], [0, 0, 1, 1], [], []>} : vector<32x32xf32>, vector<32x32xf32>, vector<32x32xf32> -> vector<32x32xf32>
    %109 = vector.extract_strided_slice %7 {offsets = [1, 0], sizes = [1, 32], strides = [1, 1]} : vector<2x32xf32> to vector<1x32xf32>
    %110 = vector.shape_cast %109 : vector<1x32xf32> to vector<32xf32>
    %111 = vector.shape_cast %110 : vector<32xf32> to vector<1x32xf32>
    %112 = vector.broadcast %111 : vector<1x32xf32> to vector<32x32xf32>
    %113 = arith.addf %108, %112 : vector<32x32xf32>
    %cst_32 = arith.constant 0.000000e+00 : f32
    %114 = vector.broadcast %cst_32 : f32 to vector<32x32xf32>
    %115 = arith.subf %114, %113 : vector<32x32xf32>
    %116 = math.exp %115 : vector<32x32xf32>
    %cst_33 = arith.constant 1.000000e+00 : f32
    %117 = vector.broadcast %cst_33 : f32 to vector<32x32xf32>
    %118 = arith.addf %117, %116 : vector<32x32xf32>
    %119 = tpu.reciprocal %118 {approx = true} : vector<32x32xf32> -> vector<32x32xf32>
    %cst_34 = arith.constant 1.000000e+00 : f32
    %120 = vector.broadcast %cst_34 : f32 to vector<32x32xf32>
    %121 = arith.subf %120, %119 : vector<32x32xf32>
    %122 = arith.mulf %0, %121 : vector<32x32xf32>
    %123 = arith.mulf %105, %119 : vector<32x32xf32>
    %124 = arith.addf %122, %123 : vector<32x32xf32>
    %cst_35 = arith.constant dense<0.000000e+00> : vector<32xf32>
    %125 = vector.multi_reduction <add>, %124, %cst_35 [1] : vector<32x32xf32> to vector<32xf32>
    %126 = vector.shape_cast %125 : vector<32xf32> to vector<32x1xf32>
    %cst_36 = arith.constant 3.200000e+01 : f32
    %127 = vector.broadcast %cst_36 : f32 to vector<32x1xf32>
    %128 = arith.divf %126, %127 : vector<32x1xf32>
    %129 = vector.broadcast %128 : vector<32x1xf32> to vector<32x32xf32>
    %130 = arith.subf %124, %129 : vector<32x32xf32>
    %131 = arith.mulf %130, %130 : vector<32x32xf32>
    %cst_37 = arith.constant dense<0.000000e+00> : vector<32xf32>
    %132 = vector.multi_reduction <add>, %131, %cst_37 [1] : vector<32x32xf32> to vector<32xf32>
    %133 = vector.shape_cast %132 : vector<32xf32> to vector<32x1xf32>
    %cst_38 = arith.constant 3.200000e+01 : f32
    %134 = vector.broadcast %cst_38 : f32 to vector<32x1xf32>
    %135 = arith.divf %133, %134 : vector<32x1xf32>
    %136 = vector.broadcast %128 : vector<32x1xf32> to vector<32x32xf32>
    %137 = arith.subf %124, %136 : vector<32x32xf32>
    %cst_39 = arith.constant 9.99999974E-6 : f32
    %138 = vector.broadcast %cst_39 : f32 to vector<32x1xf32>
    %139 = arith.addf %135, %138 : vector<32x1xf32>
    %140 = math.rsqrt %139 : vector<32x1xf32>
    %141 = vector.broadcast %140 : vector<32x1xf32> to vector<32x32xf32>
    %142 = arith.mulf %137, %141 : vector<32x32xf32>
    %143 = vector.extract_strided_slice %8 {offsets = [0, 0], sizes = [1, 32], strides = [1, 1]} : vector<2x32xf32> to vector<1x32xf32>
    %144 = vector.shape_cast %143 : vector<1x32xf32> to vector<32xf32>
    %145 = vector.shape_cast %144 : vector<32xf32> to vector<1x32xf32>
    %146 = vector.broadcast %145 : vector<1x32xf32> to vector<32x32xf32>
    %147 = arith.mulf %142, %146 : vector<32x32xf32>
    %148 = vector.extract_strided_slice %8 {offsets = [1, 0], sizes = [1, 32], strides = [1, 1]} : vector<2x32xf32> to vector<1x32xf32>
    %149 = vector.shape_cast %148 : vector<1x32xf32> to vector<32xf32>
    %150 = vector.shape_cast %149 : vector<32xf32> to vector<1x32xf32>
    %151 = vector.broadcast %150 : vector<1x32xf32> to vector<32x32xf32>
    %152 = arith.addf %147, %151 : vector<32x32xf32>
    %cst_40 = arith.constant 0.000000e+00 : f32
    %153 = vector.shape_cast %3 : vector<32x1xi1> to vector<32x1xi1>
    %154 = vector.broadcast %153 : vector<32x1xi1> to vector<32x32xi1>
    %155 = vector.broadcast %cst_40 : f32 to vector<32x32xf32>
    %156 = arith.select %154, %155, %152 : vector<32x32xi1>, vector<32x32xf32>
    %c0_41 = arith.constant 0 : index
    %c0_42 = arith.constant 0 : index
    %157 = vector.load %arg7[%c0_41, %c0_42] : memref<32x32xf32, #tpu.memory_space<vmem>>, vector<32x32xf32>
    tpu.vector_store %arg7[%c0_41, %c0_42], %156 {strides = array<i32>} : memref<32x32xf32, #tpu.memory_space<vmem>>, vector<32x32xf32>,
    return
  }
}

</mosaic_0001>

<llo_original>
// kernel: tpu_custom_call.1
$region0: #{tpu_custom_call.1}
  #allocation0 [shape = 'u32[]', space=smem, size = 0x4, offset = 0x4, fixed_abs, tag = 'smem constant byte address 0x4 - core index']
  #allocation1 [shape = 'u32[72,128]{1,0:T(1,128)}', space=vmem, size = 0x9000, scoped, tag = 'internal scratch']
  %s0 = inlined_call_operand.vmem [shape: f32[32,32], index: 0, kind: input, shape index: {}]
  %s1 = inlined_call_operand.vmem [shape: f32[32,1], index: 1, kind: input, shape index: {}]
  %s2 = inlined_call_operand.vmem [shape: f32[2,3,32], index: 2, kind: input, shape index: {}]
  %s3 = inlined_call_operand.vmem [shape: f32[2,32], index: 3, kind: input, shape index: {}]
  %s4 = inlined_call_operand.hbm [shape: f32[2,32,32], index: 4, kind: input, shape index: {}]
  %s5 = inlined_call_operand.vmem [shape: f32[2,32], index: 5, kind: input, shape index: {}]
  %s6 = inlined_call_operand.vmem [shape: f32[2,32], index: 6, kind: input, shape index: {}]
  %s7 = inlined_call_operand.hbm [shape: f32[32,32], index: 7, kind: output, shape index: {}]
  %s8 = sld [smem:[#allocation0]]
  $region42: #{tpu_custom_call.1} parent=0
    _
  %s10 = ssub.s32 1, %s8
  %s11 = scalar_select 0, %s10, %s8
  $region1: #{tpu_custom_call.1} parent=0
    #allocation2 [shape = 'u8[32768]{0}', space=vmem, size = 0x8000, scoped, tag = 'input window, operand 4, single buffered']
    #allocation3 [shape = 's32[1]{0}', space=sflag, size = 0x4, scoped, tag = 'scoped memory for tpu_custom_call.1']
    #allocation4 [shape = 's32[1]{0}', space=sflag, size = 0x4, scoped, tag = 'scoped memory for tpu_custom_call.1']
    #allocation5 [shape = 'u8[16384]{0}', space=vmem, size = 0x4000, scoped, tag = 'output window, operand 0, single buffered']
    %12 = vsyncpa [#allocation3], 0
    %13 = vsyncpa [#allocation4], 0
    // Predicated region
    $region2: #{tpu_custom_call.1} parent=1 // pred_check
      _
    $region3: #{tpu_custom_call.1} parent=1 // pred_check_branch
      %15 = sbr.rel (0) target = $region5
    $region4: #{tpu_custom_call.1} parent=1 // pred_region
      _
    $region5: #{tpu_custom_call.1} parent=1 // pred_fallthru
      _
    // Predicated region
    $region6: #{tpu_custom_call.1} parent=1 // pred_check
      _
    $region7: #{tpu_custom_call.1} parent=1 // pred_check_branch
      %17 = sbr.rel (0) target = $region9
    $region8: #{tpu_custom_call.1} parent=1 // pred_region
      _
    $region9: #{tpu_custom_call.1} parent=1 // pred_fallthru
      _
    // Predicated region
    $region10: #{tpu_custom_call.1} parent=1 // pred_check
      _
    $region11: #{tpu_custom_call.1} parent=1 // pred_check_branch
      %19 = sbr.rel (0) target = $region13
    $region12: #{tpu_custom_call.1} parent=1 // pred_region
      _
    $region13: #{tpu_custom_call.1} parent=1 // pred_fallthru
      _
    // Predicated region
    $region14: #{tpu_custom_call.1} parent=1 // pred_check
      _
    $region15: #{tpu_custom_call.1} parent=1 // pred_check_branch
      %21 = sbr.rel (0) target = $region17
    $region16: #{tpu_custom_call.1} parent=1 // pred_region
      _
    $region17: #{tpu_custom_call.1} parent=1 // pred_fallthru
      _
    // Predicated region
    $region18: #{tpu_custom_call.1} parent=1 // pred_check
      _
    $region19: #{tpu_custom_call.1} parent=1 // pred_check_branch
      %23 = sbr.rel (0) target = $region21
    $region20: #{tpu_custom_call.1} parent=1 // pred_region
      %25 = vsyncadd [#allocation3], 0
      %s26 = sshll.u32 %s4, 4
      %s27 = int_to_ptr.hbm [resolvable:$true] %s26
      %s28 = sshll.u32 [#allocation2], 4
      %s29 = int_to_ptr.vmem [resolvable:$true] %s28
      %34 = dma.hbm_to_vmem [thread:$0]  %s27, 1024, %s29, [#allocation3], 128, 128, 8
    $region21: #{tpu_custom_call.1} parent=1 // pred_fallthru
      _
    // Predicated region
    $region22: #{tpu_custom_call.1} parent=1 // pred_check
      _
    $region23: #{tpu_custom_call.1} parent=1 // pred_check_branch
      %36 = sbr.rel (0) target = $region25
    $region24: #{tpu_custom_call.1} parent=1 // pred_region
      _
    $region25: #{tpu_custom_call.1} parent=1 // pred_fallthru
      _
    // Predicated region
    $region26: #{tpu_custom_call.1} parent=1 // pred_check
      _
    $region27: #{tpu_custom_call.1} parent=1 // pred_check_branch
      %38 = sbr.rel (0) target = $region29
    $region28: #{tpu_custom_call.1} parent=1 // pred_region
      _
    $region29: #{tpu_custom_call.1} parent=1 // pred_fallthru
      _
    // Predicated region
    $region30: #{tpu_custom_call.1} parent=1 // pred_check
      _
    $region31: #{tpu_custom_call.1} parent=1 // pred_check_branch
      %40 = sbr.rel (0) target = $region33
    $region32: #{tpu_custom_call.1} parent=1 // pred_region
      %42 = dma.done [#allocation3], 1024
    $region33: #{tpu_custom_call.1} parent=1 // pred_fallthru
      _
    %v43 = vld [vmem:[%s0] sm:$0xff]
    %v44 = vld [vmem:[%s0 + $0x8] sm:$0xff]
    %v45 = vld [vmem:[%s0 + $0x10] sm:$0xff]
    %v46 = vld [vmem:[%s0 + $0x18] sm:$0xff]
    %v47 = vld [vmem:[%s1] sm:$0xff]
    %v48 = vld [vmem:[%s1 + $0x8] sm:$0xff]
    %v49 = vld [vmem:[%s1 + $0x10] sm:$0xff]
    %v50 = vld [vmem:[%s1 + $0x18] sm:$0xff]
    %vm51 = vcmp.gt.f32.partialorder %v47, 0.5
    %vm52 = vcmp.gt.f32.partialorder %v48, 0.5
    %vm53 = vcmp.gt.f32.partialorder %v49, 0.5
    %vm54 = vcmp.gt.f32.partialorder %v50, 0.5
    %v55 = vld [vmem:[%s2] sm:$0x7]
    %v56 = vld [vmem:[%s2 + $0x4] sm:$0x7]
    %v57 = vld [vmem:[%s3] sm:$0x3]
    %v58 = vld [vmem:[#allocation2] sm:$0xff]
    %v59 = vld [vmem:[#allocation2 + $0x8] sm:$0xff]
    %v60 = vld [vmem:[#allocation2 + $0x10] sm:$0xff]
    %v61 = vld [vmem:[#allocation2 + $0x18] sm:$0xff]
    %v62 = vld [vmem:[#allocation2 + $0x20] sm:$0xff]
    %v63 = vld [vmem:[#allocation2 + $0x28] sm:$0xff]
    %v64 = vld [vmem:[#allocation2 + $0x30] sm:$0xff]
    %v65 = vld [vmem:[#allocation2 + $0x38] sm:$0xff]
    %v66 = vld [vmem:[%s5] sm:$0x3]
    %v67 = vld [vmem:[%s6] sm:$0x3]
    %v68 = vlaneseq
    %v69 = vshrl.u32 %v68, 7
    %v70 = vadd.s32 %v69, 8
    %v71 = vadd.s32 %v69, 16
    %v72 = vadd.s32 %v69, 24
    %vm73 = vcmp.lt.s32.totalorder %v69, 0
    %v74 = vsub.s32 0, %v69
    %v75 = vsel %vm73, %v74, %v69
    %v76 = vshrl.u32 %v75, 4
    %v77 = vand.u32 %v75, 15
    %v78 = vsub.s32 0, %v77
    %v79 = vsel %vm73, %v78, %v77
    %vm80 = vcmp.lt.s32.totalorder %v70, 0
    %v81 = vsub.s32 0, %v70
    %v82 = vsel %vm80, %v81, %v70
    %v83 = vshrl.u32 %v82, 4
    %v84 = vand.u32 %v82, 15
    %v85 = vsub.s32 0, %v84
    %v86 = vsel %vm80, %v85, %v84
    %vm87 = vcmp.lt.s32.totalorder %v71, 0
    %v88 = vsub.s32 0, %v71
    %v89 = vsel %vm87, %v88, %v71
    %v90 = vshrl.u32 %v89, 4
    %v91 = vand.u32 %v89, 15
    %v92 = vsub.s32 0, %v91
    %v93 = vsel %vm87, %v92, %v91
    %vm94 = vcmp.lt.s32.totalorder %v72, 0
    %v95 = vsub.s32 0, %v72
    %v96 = vsel %vm94, %v95, %v72
    %v97 = vshrl.u32 %v96, 4
    %v98 = vand.u32 %v96, 15
    %v99 = vsub.s32 0, %v98
    %v100 = vsel %vm94, %v99, %v98
    %vm101 = vcmp.ne.s32.totalorder %v79, 0
    %vm102 = vcmp.ne.s32.totalorder %v86, 0
    %vm103 = vcmp.ne.s32.totalorder %v93, 0
    %vm104 = vcmp.ne.s32.totalorder %v100, 0
    %vm105 = vcmp.lt.s32.totalorder %v79, 0
    %vm106 = vcmp.lt.s32.totalorder %v86, 0
    %vm107 = vcmp.lt.s32.totalorder %v93, 0
    %vm108 = vcmp.lt.s32.totalorder %v100, 0
    %vm109 = vmand %vm105, %vm101
    %vm110 = vmand %vm106, %vm102
    %vm111 = vmand %vm107, %vm103
    %vm112 = vmand %vm108, %vm104
    %v113 = vadd.s32 %v79, 16
    %v114 = vadd.s32 %v86, 16
    %v115 = vadd.s32 %v93, 16
    %v116 = vadd.s32 %v100, 16
    %v117 = vsel %vm109, %v113, %v79
    %v118 = vsel %vm110, %v114, %v86
    %v119 = vsel %vm111, %v115, %v93
    %v120 = vsel %vm112, %v116, %v100
    %v121 = vperm.slane %v57, 0
    %v122 = vadd.f32 %v121, 0.0
    %v123 = vperm.slane %v57, 1
    %v124 = vadd.f32 %v123, 0.0
    %v125 = vrot.slane %v43, 7
    %v126 = vrot.slane %v44, 7
    %v127 = vrot.slane %v45, 7
    %v128 = vrot.slane %v46, 7
    %vm129 = vcmp.lt.s32.totalorder %v69, 1
    %v130 = vsel %vm129, %v127, %v128
    %v131 = vsel %vm129, %v126, %v127
    %v132 = vsel %vm129, %v125, %v126
    %v133 = vsel %vm129, %v128, %v125
    %v134 = vadd.s32 %v117, 4294967295
    %v135 = vadd.s32 %v118, 4294967295
    %v136 = vadd.s32 %v119, 4294967295
    %v137 = vadd.s32 %v120, 4294967295
    %vm138 = vcmp.ge.s32.totalorder %v134, 0
    %vm139 = vcmp.ge.s32.totalorder %v135, 0
    %vm140 = vcmp.ge.s32.totalorder %v136, 0
    %vm141 = vcmp.ge.s32.totalorder %v137, 0
    %vm142 = vcmp.lt.s32.totalorder %v134, 16
    %vm143 = vcmp.lt.s32.totalorder %v135, 16
    %vm144 = vcmp.lt.s32.totalorder %v136, 16
    %vm145 = vcmp.lt.s32.totalorder %v137, 16
    %vm146 = vmand %vm138, %vm142
    %vm147 = vmand %vm139, %vm143
    %vm148 = vmand %vm140, %vm144
    %vm149 = vmand %vm141, %vm145
    %v150 = vsel %vm146, %v133, 0.0
    %v151 = vsel %vm147, %v132, 0.0
    %v152 = vsel %vm148, %v131, 0.0
    %v153 = vsel %vm149, %v130, 0.0
    %v154 = vperm.slane %v55, 0
    %v155 = vmul.f32 %v154, %v150
    %v156 = vmul.f32 %v154, %v151
    %v157 = vmul.f32 %v154, %v152
    %v158 = vmul.f32 %v154, %v153
    %v159 = vadd.f32 %v122, %v155
    %v160 = vadd.f32 %v122, %v156
    %v161 = vadd.f32 %v122, %v157
    %v162 = vadd.f32 %v122, %v158
    %v163 = vperm.slane %v56, 0
    %v164 = vmul.f32 %v163, %v150
    %v165 = vmul.f32 %v163, %v151
    %v166 = vmul.f32 %v163, %v152
    %v167 = vmul.f32 %v163, %v153
    %v168 = vadd.f32 %v124, %v164
    %v169 = vadd.f32 %v124, %v165
    %v170 = vadd.f32 %v124, %v166
    %v171 = vadd.f32 %v124, %v167
    %v172 = vperm.slane %v55, 1
    %v173 = vmul.f32 %v172, %v43
    %v174 = vmul.f32 %v172, %v44
    %v175 = vmul.f32 %v172, %v45
    %v176 = vmul.f32 %v172, %v46
    %v177 = vadd.f32 %v159, %v173
    %v178 = vadd.f32 %v160, %v174
    %v179 = vadd.f32 %v161, %v175
    %v180 = vadd.f32 %v162, %v176
    %v181 = vperm.slane %v56, 1
    %v182 = vmul.f32 %v181, %v43
    %v183 = vmul.f32 %v181, %v44
    %v184 = vmul.f32 %v181, %v45
    %v185 = vmul.f32 %v181, %v46
    %v186 = vadd.f32 %v168, %v182
    %v187 = vadd.f32 %v169, %v183
    %v188 = vadd.f32 %v170, %v184
    %v189 = vadd.f32 %v171, %v185
    %v190 = vrot.slane %v43, 1
    %v191 = vrot.slane %v44, 1
    %v192 = vrot.slane %v45, 1
    %v193 = vrot.slane %v46, 1
    %vm194 = vcmp.lt.s32.totalorder %v69, 7
    %v195 = vsel %vm194, %v192, %v193
    %v196 = vsel %vm194, %v191, %v192
    %v197 = vsel %vm194, %v190, %v191
    %v198 = vsel %vm194, %v193, %v190
    %v199 = vadd.s32 %v117, 1
    %v200 = vadd.s32 %v118, 1
    %v201 = vadd.s32 %v119, 1
    %v202 = vadd.s32 %v120, 1
    %vm203 = vcmp.ge.s32.totalorder %v199, 0
    %vm204 = vcmp.ge.s32.totalorder %v200, 0
    %vm205 = vcmp.ge.s32.totalorder %v201, 0
    %vm206 = vcmp.ge.s32.totalorder %v202, 0
    %vm207 = vcmp.lt.s32.totalorder %v199, 16
    %vm208 = vcmp.lt.s32.totalorder %v200, 16
    %vm209 = vcmp.lt.s32.totalorder %v201, 16
    %vm210 = vcmp.lt.s32.totalorder %v202, 16
    %vm211 = vmand %vm203, %vm207
    %vm212 = vmand %vm204, %vm208
    %vm213 = vmand %vm205, %vm209
    %vm214 = vmand %vm206, %vm210
    %v215 = vsel %vm211, %v197, 0.0
    %v216 = vsel %vm212, %v196, 0.0
    %v217 = vsel %vm213, %v195, 0.0
    %v218 = vsel %vm214, %v198, 0.0
    %v219 = vperm.slane %v55, 2
    %v220 = vmul.f32 %v219, %v215
    %v221 = vmul.f32 %v219, %v216
    %v222 = vmul.f32 %v219, %v217
    %v223 = vmul.f32 %v219, %v218
    %v224 = vadd.f32 %v177, %v220
    %v225 = vadd.f32 %v178, %v221
    %v226 = vadd.f32 %v179, %v222
    %v227 = vadd.f32 %v180, %v223
    %v228 = vperm.slane %v56, 2
    %v229 = vmul.f32 %v228, %v215
    %v230 = vmul.f32 %v228, %v216
    %v231 = vmul.f32 %v228, %v217
    %v232 = vmul.f32 %v228, %v218
    %v233 = vadd.f32 %v186, %v229
    %v234 = vadd.f32 %v187, %v230
    %v235 = vadd.f32 %v188, %v231
    %v236 = vadd.f32 %v189, %v232
    %v237 = vperm.slane %v66, 0
    %vm238 = vcmask 261120
    %v240 = vsel %vm238, %v224, 0
    %v243 = vsel %vm238, %v225, 0
    %v246 = vsel %vm238, %v226, 0
    %v249 = vsel %vm238, %v227, 0
    %251 = vmatpush.msra.mxu0 0.0
    %252 = vmatpush.msra.mxu0 0.0
    %253 = vmatpush.msra.mxu0 0.0
    %254 = vmatpush.msra.mxu0 0.0
    %255 = vmatpush.msra.mxu0 0.0
    %256 = vmatpush.msra.mxu0 0.0
    %257 = vmatpush.msra.mxu0 0.0
    %258 = vmatpush.msra.mxu0 0.0
    %259 = vmatpush.msra.mxu0 0.0
    %260 = vmatpush.msra.mxu0 0.0
    %261 = vmatpush.msra.mxu0 0.0
    %262 = vmatpush.msra.mxu0 0.0
    %263 = vmatpush.msra.mxu0 %v61
    %264 = vmatpush.msra.mxu0 %v60
    %265 = vmatpush.msra.mxu0 %v59
    %266 = vmatpush.msra.mxu0 %v58
    %267 = vmatmul.f32.gmra.mxu0 %v240
    %v268 = vpop.f32.mrf.mxu0
    %v269 = vadd.f32 %v237, %v268
    %270 = vmatmul.f32.gmra.mxu0 %v243
    %v271 = vpop.f32.mrf.mxu0
    %v272 = vadd.f32 %v237, %v271
    %273 = vmatmul.f32.gmra.mxu0 %v246
    %v274 = vpop.f32.mrf.mxu0
    %v275 = vadd.f32 %v237, %v274
    %276 = vmatmul.f32.gmra.mxu0 %v249
    %v277 = vpop.f32.mrf.mxu0
    %v278 = vadd.f32 %v237, %v277
    %279 = vdwg.mxu0
    %v280 = vperm.slane %v66, 1
    %v282 = vsel %vm238, %v233, 0
    %v285 = vsel %vm238, %v234, 0
    %v288 = vsel %vm238, %v235, 0
    %v291 = vsel %vm238, %v236, 0
    %293 = vmatpush.msra.mxu0 0.0
    %294 = vmatpush.msra.mxu0 0.0
    %295 = vmatpush.msra.mxu0 0.0
    %296 = vmatpush.msra.mxu0 0.0
    %297 = vmatpush.msra.mxu0 0.0
    %298 = vmatpush.msra.mxu0 0.0
    %299 = vmatpush.msra.mxu0 0.0
    %300 = vmatpush.msra.mxu0 0.0
    %301 = vmatpush.msra.mxu0 0.0
    %302 = vmatpush.msra.mxu0 0.0
    %303 = vmatpush.msra.mxu0 0.0
    %304 = vmatpush.msra.mxu0 0.0
    %305 = vmatpush.msra.mxu0 %v65
    %306 = vmatpush.msra.mxu0 %v64
    %307 = vmatpush.msra.mxu0 %v63
    %308 = vmatpush.msra.mxu0 %v62
    %309 = vmatmul.f32.gmra.mxu0 %v282
    %v310 = vpop.f32.mrf.mxu0
    %v311 = vadd.f32 %v280, %v310
    %312 = vmatmul.f32.gmra.mxu0 %v285
    %v313 = vpop.f32.mrf.mxu0
    %v314 = vadd.f32 %v280, %v313
    %315 = vmatmul.f32.gmra.mxu0 %v288
    %v316 = vpop.f32.mrf.mxu0
    %v317 = vadd.f32 %v280, %v316
    %318 = vmatmul.f32.gmra.mxu0 %v291
    %v319 = vpop.f32.mrf.mxu0
    %v320 = vadd.f32 %v280, %v319
    %321 = vdwg.mxu0
    %v322 = vsub.f32 0.0, %v311
    %v323 = vsub.f32 0.0, %v314
    %v324 = vsub.f32 0.0, %v317
    %v325 = vsub.f32 0.0, %v320
    %v326 = vmul.f32 %v322, 1.442695
    %v327 = vpow.pop %v326
    %v328 = vmul.f32 %v323, 1.442695
    %v329 = vpow.pop %v328
    %v330 = vmul.f32 %v324, 1.442695
    %v331 = vpow.pop %v330
    %v332 = vmul.f32 %v325, 1.442695
    %v333 = vpow.pop %v332
    %v334 = vadd.f32 %v327, 1.0
    %v335 = vadd.f32 %v329, 1.0
    %v336 = vadd.f32 %v331, 1.0
    %v337 = vadd.f32 %v333, 1.0
    %v338 = vrcp.pop %v334
    %v339 = vrcp.pop %v335
    %v340 = vrcp.pop %v336
    %v341 = vrcp.pop %v337
    %v342 = vsub.f32 1.0, %v338
    %v343 = vsub.f32 1.0, %v339
    %v344 = vsub.f32 1.0, %v340
    %v345 = vsub.f32 1.0, %v341
    %v346 = vmul.f32 %v43, %v342
    %v347 = vmul.f32 %v44, %v343
    %v348 = vmul.f32 %v45, %v344
    %v349 = vmul.f32 %v46, %v345
    %v350 = vmul.f32 %v269, %v338
    %v351 = vmul.f32 %v272, %v339
    %v352 = vmul.f32 %v275, %v340
    %v353 = vmul.f32 %v278, %v341
    %v354 = vadd.f32 %v346, %v350
    %v355 = vadd.f32 %v347, %v351
    %v356 = vadd.f32 %v348, %v352
    %v357 = vadd.f32 %v349, %v353
    %v358 = vsel %vm238, %v354, 0.0
    %359 = vadd.xlane.f32.xlu0 %v358
    %v360 = vpop.xlane.xlu0 %359
    %v361 = vsel %vm238, %v355, 0.0
    %362 = vadd.xlane.f32.xlu0 %v361
    %v363 = vpop.xlane.xlu0 %362
    %v364 = vsel %vm238, %v356, 0.0
    %365 = vadd.xlane.f32.xlu0 %v364
    %v366 = vpop.xlane.xlu0 %365
    %v367 = vsel %vm238, %v357, 0.0
    %368 = vadd.xlane.f32.xlu0 %v367
    %v369 = vpop.xlane.xlu0 %368
    %v370 = vrcp.pop 32.0
    %v371 = vmul.f32 32.0, %v370
    %v372 = vsub.f32 1.0, %v371
    %v373 = vmul.f32 %v370, %v372
    %v374 = vadd.f32 %v370, %v373
    %vm375 = vweird.f32 %v370
    %v376 = vsel %vm375, %v370, %v374
    %v377 = vmul.f32 %v360, %v376
    %v378 = vmul.f32 %v363, %v376
    %v379 = vmul.f32 %v366, %v376
    %v380 = vmul.f32 %v369, %v376
    %v381 = vsub.f32 %v354, %v377
    %v382 = vsub.f32 %v355, %v378
    %v383 = vsub.f32 %v356, %v379
    %v384 = vsub.f32 %v357, %v380
    %v385 = vmul.f32 %v381, %v381
    %v386 = vmul.f32 %v382, %v382
    %v387 = vmul.f32 %v383, %v383
    %v388 = vmul.f32 %v384, %v384
    %v389 = vsel %vm238, %v385, 0.0
    %390 = vadd.xlane.f32.xlu0 %v389
    %v391 = vpop.xlane.xlu0 %390
    %v392 = vsel %vm238, %v386, 0.0
    %393 = vadd.xlane.f32.xlu0 %v392
    %v394 = vpop.xlane.xlu0 %393
    %v395 = vsel %vm238, %v387, 0.0
    %396 = vadd.xlane.f32.xlu0 %v395
    %v397 = vpop.xlane.xlu0 %396
    %v398 = vsel %vm238, %v388, 0.0
    %399 = vadd.xlane.f32.xlu0 %v398
    %v400 = vpop.xlane.xlu0 %399
    %v401 = vmul.f32 %v391, %v376
    %v402 = vmul.f32 %v394, %v376
    %v403 = vmul.f32 %v397, %v376
    %v404 = vmul.f32 %v400, %v376
    %v405 = vadd.f32 %v401, 1e-05
    %v406 = vadd.f32 %v402, 1e-05
    %v407 = vadd.f32 %v403, 1e-05
    %v408 = vadd.f32 %v404, 1e-05
    %v409 = vrsqrt.pop %v405
    %v410 = vmul.f32 %v409, %v405
    %v411 = vmul.f32 %v410, %v409
    %v412 = vmul.f32 0.5, %v411
    %v413 = vsub.f32 1.5, %v412
    %v414 = vmul.f32 %v409, %v413
    %vm415 = vweird.f32 %v405
    %vm416 = vweird.f32 %v409
    %vm417 = vmor %vm415, %vm416
    %v418 = vsel %vm417, %v409, %v414
    %v419 = vrsqrt.pop %v406
    %v420 = vmul.f32 %v419, %v406
    %v421 = vmul.f32 %v420, %v419
    %v422 = vmul.f32 0.5, %v421
    %v423 = vsub.f32 1.5, %v422
    %v424 = vmul.f32 %v419, %v423
    %vm425 = vweird.f32 %v406
    %vm426 = vweird.f32 %v419
    %vm427 = vmor %vm425, %vm426
    %v428 = vsel %vm427, %v419, %v424
    %v429 = vrsqrt.pop %v407
    %v430 = vmul.f32 %v429, %v407
    %v431 = vmul.f32 %v430, %v429
    %v432 = vmul.f32 0.5, %v431
    %v433 = vsub.f32 1.5, %v432
    %v434 = vmul.f32 %v429, %v433
    %vm435 = vweird.f32 %v407
    %vm436 = vweird.f32 %v429
    %vm437 = vmor %vm435, %vm436
    %v438 = vsel %vm437, %v429, %v434
    %v439 = vrsqrt.pop %v408
    %v440 = vmul.f32 %v439, %v408
    %v441 = vmul.f32 %v440, %v439
    %v442 = vmul.f32 0.5, %v441
    %v443 = vsub.f32 1.5, %v442
    %v444 = vmul.f32 %v439, %v443
    %vm445 = vweird.f32 %v408
    %vm446 = vweird.f32 %v439
    %vm447 = vmor %vm445, %vm446
    %v448 = vsel %vm447, %v439, %v444
    %v449 = vmul.f32 %v381, %v418
    %v450 = vmul.f32 %v382, %v428
    %v451 = vmul.f32 %v383, %v438
    %v452 = vmul.f32 %v384, %v448
    %v453 = vperm.slane %v67, 0
    %v454 = vmul.f32 %v449, %v453
    %v455 = vmul.f32 %v450, %v453
    %v456 = vmul.f32 %v451, %v453
    %v457 = vmul.f32 %v452, %v453
    %v458 = vperm.slane %v67, 1
    %v459 = vadd.f32 %v454, %v458
    %v460 = vadd.f32 %v455, %v458
    %v461 = vadd.f32 %v456, %v458
    %v462 = vadd.f32 %v457, %v458
    %v463 = vsel %vm51, 1, 0
    %v464 = vsel %vm52, 1, 0
    %v465 = vsel %vm53, 1, 0
    %v466 = vsel %vm54, 1, 0
    %467 = vset.pattern.permute.xlu0 0
    %468 = vperm.xlu0 %467, %v463
    %v469 = vpop.permute.xlu0 %468
    %470 = vset.pattern.permute.xlu0 0
    %471 = vperm.xlu0 %470, %v464
    %v472 = vpop.permute.xlu0 %471
    %473 = vset.pattern.permute.xlu0 0
    %474 = vperm.xlu0 %473, %v465
    %v475 = vpop.permute.xlu0 %474
    %476 = vset.pattern.permute.xlu0 0
    %477 = vperm.xlu0 %476, %v466
    %v478 = vpop.permute.xlu0 %477
    %vm479 = vcmp.eq.s32.totalorder %v469, 1
    %vm480 = vcmp.eq.s32.totalorder %v472, 1
    %vm481 = vcmp.eq.s32.totalorder %v475, 1
    %vm482 = vcmp.eq.s32.totalorder %v478, 1
    %v483 = vsel %vm479, 0.0, %v459
    %v484 = vsel %vm480, 0.0, %v460
    %v485 = vsel %vm481, 0.0, %v461
    %v486 = vsel %vm482, 0.0, %v462
    %487 = vst.msk [vmem:[#allocation5] sm:$0xff] %vm238, %v483
    %488 = vst.msk [vmem:[#allocation5 + $0x8] sm:$0xff] %vm238, %v484
    %489 = vst.msk [vmem:[#allocation5 + $0x10] sm:$0xff] %vm238, %v485
    %490 = vst.msk [vmem:[#allocation5 + $0x18] sm:$0xff] %vm238, %v486
    // Predicated region
    $region34: #{tpu_custom_call.1} parent=1 // pred_check
      _
    $region35: #{tpu_custom_call.1} parent=1 // pred_check_branch
      %492 = sbr.rel (0) target = $region37
    $region36: #{tpu_custom_call.1} parent=1 // pred_region
      %494 = vsyncadd [#allocation4], 0
      %s495 = sshll.u32 [#allocation5], 4
      %s496 = int_to_ptr.vmem [resolvable:$true] %s495
      %s497 = sshll.u32 %s7, 4
      %s498 = int_to_ptr.hbm [resolvable:$true] %s497
      %503 = dma.vmem_to_hbm [thread:$0]  %s496, 512, %s498, [#allocation4], 128, 128, 8
    $region37: #{tpu_custom_call.1} parent=1 // pred_fallthru
      _
    // Predicated region
    $region38: #{tpu_custom_call.1} parent=1 // pred_check
      _
    $region39: #{tpu_custom_call.1} parent=1 // pred_check_branch
      %505 = sbr.rel (0) target = $region41
    $region40: #{tpu_custom_call.1} parent=1 // pred_region
      %507 = dma.done [#allocation4], 512
    $region41: #{tpu_custom_call.1} parent=1 // pred_fallthru
      _
    %508 = vsyncpa [#allocation3], 1
    %509 = vsyncpa [#allocation4], 1

</llo_original>
